<compile_context>
chip_gen: v7x
topology: tpu7x:2x2x1
jax: 0.10.0
libtpu: 0.0.40
codegen_flags: <defaults>
</compile_context>

<pallas_src>
import functools
import math

import jax
import jax.numpy as jnp
from jax import lax
from jax.experimental import pallas as pl
from jax.experimental.pallas import tpu as pltpu

_LANES = 128
_SUBLANES = 8
_ACC_ROWS_MAX = 64            # (64, 128) f32 accumulator = 32 KiB, 8 independent add chains
_BASE_MAX_TILE_ROWS = 8192    # (8192, 128) f32 block = 4 MiB (8 MiB double-buffered)
_PALLAS_MIN_ELEMS = 131072    # below this, fused XLA reduce beats pallas_call fixed cost


def _cdiv(a, b):
    return (a + b - 1) // b


def _neg_mean_kernel(x_ref, acc_ref, *, tile_rows, acc_rows, rows_valid, has_tail):
    """Accumulates per-(row, lane) partial sums of x into the resident acc_ref block."""
    i = pl.program_id(0)

    @pl.when(i == 0)
    def _init():
        acc_ref[...] = jnp.zeros_like(acc_ref)

    x = x_ref[...].astype(jnp.float32)

    def fold(v):
        # acc_rows/8 vregs -> several independent VALU chains; latency hides under DMA.
        return v.reshape(tile_rows // acc_rows, acc_rows, _LANES).sum(axis=0)

    if has_tail:
        last = pl.num_programs(0) - 1

        @pl.when(i < last)
        def _interior():
            # Unmasked fast path: no iota / compare / select on interior blocks.
            acc_ref[...] += fold(x)

        @pl.when(i == last)
        def _tail():
            row0 = i * tile_rows
            row_ids = row0 + lax.broadcasted_iota(jnp.int32, (tile_rows, _LANES), 0)
            # Select (not multiply) so garbage NaN/Inf in out-of-bounds rows cannot leak.
            acc_ref[...] += fold(jnp.where(row_ids < rows_valid, x, 0.0))
    else:
        acc_ref[...] += fold(x)


def wasserstein_neg_loss(x, y=None):
    """Pallas TPU implementation of WassersteinNegLoss.forward: -mean(x)."""
    del y  # unused, exactly as in the reference module
    n_elems = x.size
    result_dtype = x.dtype if jnp.issubdtype(x.dtype, jnp.floating) else jnp.float32

    if n_elems == 0:
        # torch.mean of an empty tensor is NaN.
        return jnp.asarray(jnp.nan, dtype=result_dtype)

    if n_elems < _PALLAS_MIN_ELEMS:
        # Small-input fast path: pallas_call prologue would dwarf the actual work.
        return (-jnp.mean(x.astype(jnp.float32))).astype(result_dtype)

    flat = jnp.ravel(x)                       # free reshape; native dtype preserved
    rows = _cdiv(n_elems, _LANES)
    lane_pad = rows * _LANES - n_elems
    if lane_pad:
        # Only when numel is not a multiple of 128; pads < 128 zeros.
        flat = jnp.pad(flat, (0, lane_pad))
    slab = flat.reshape(rows, _LANES)

    # Dtype-aware tiling: keep ~4 MiB of bytes per block, rows aligned to the dtype's
    # sublane packing (8 for 32-bit, 16 for bf16, 32 for 8-bit).
    itemsize = jnp.dtype(x.dtype).itemsize
    packing = max(1, 4 // max(1, itemsize))
    row_align = _SUBLANES * packing
    max_tile_rows = _BASE_MAX_TILE_ROWS * packing
    tile_rows = min(max_tile_rows, max(row_align, (rows // row_align) * row_align))
    num_tiles = _cdiv(rows, tile_rows)
    has_tail = (rows % tile_rows) != 0
    acc_rows = math.gcd(tile_rows, _ACC_ROWS_MAX)   # always a multiple of 8

    kernel = functools.partial(
        _neg_mean_kernel,
        tile_rows=tile_rows,
        acc_rows=acc_rows,
        rows_valid=rows,
        has_tail=has_tail,
    )

    partials = pl.pallas_call(
        kernel,
        out_shape=jax.ShapeDtypeStruct((acc_rows, _LANES), jnp.float32),
        grid_spec=pl.GridSpec(
            grid=(num_tiles,),
            in_specs=[pl.BlockSpec((tile_rows, _LANES), lambda i: (i, 0))],
            out_specs=pl.BlockSpec((acc_rows, _LANES), lambda i: (0, 0)),
        ),
        compiler_params=pltpu.CompilerParams(
            dimension_semantics=("arbitrary",),
        ),
    )(slab)

    # Tiny final cross-lane reduction (64 x 128 f32) + scale; negligible vs. the streaming pass.
    total = jnp.sum(partials)
    return (-total / jnp.float32(n_elems)).astype(result_dtype)


if __name__ == "__main__":
    key = jax.random.PRNGKey(0)
    k1, k2, k3, k4 = jax.random.split(key, 4)

    # Small GAN-critic-sized pair, consistent with the module's usage (fast path).
    x_small = jax.random.normal(k1, (2, 4, 16, 16), dtype=jnp.float32)
    y_small = jax.random.normal(k2, (2, 4, 16, 16), dtype=jnp.float32)
    loss_small = wasserstein_neg_loss(x_small, y_small)
    jax.block_until_ready(loss_small)
    assert jnp.allclose(loss_small, -jnp.mean(x_small), atol=1e-5, rtol=1e-4), (
        loss_small, -jnp.mean(x_small))

    # Larger input: exercises the Pallas streaming-reduction path (aligned, no tail).
    x_big = jax.random.normal(k3, (4, 8, 128, 128), dtype=jnp.float32)
    loss_big = wasserstein_neg_loss(x_big, None)
    jax.block_until_ready(loss_big)
    assert jnp.allclose(loss_big, -jnp.mean(x_big), atol=1e-5, rtol=1e-4), (
        loss_big, -jnp.mean(x_big))

    # Odd-shaped input: exercises lane padding + tail-only in-kernel row masking.
    x_odd = jax.random.normal(k4, (3, 7, 129, 131), dtype=jnp.float32)
    loss_odd = wasserstein_neg_loss(x_odd, None)
    jax.block_until_ready(loss_odd)
    assert jnp.allclose(loss_odd, -jnp.mean(x_odd), atol=1e-5, rtol=1e-4), (
        loss_odd, -jnp.mean(x_odd))

    print("KERNEL_OK")
</pallas_src>

<mosaic_0001>
module attributes {stable_mosaic.version = 11 : i64} {
  func.func @_neg_mean_kernel(%arg0: i32, %arg1: memref<4096x128xf32, #tpu.memory_space<vmem>>, %arg2: memref<64x128xf32, #tpu.memory_space<vmem>>) attributes {dimension_semantics = [#tpu.dimension_semantics<arbitrary>], iteration_bounds = array<i64: 1>, scalar_prefetch = 0 : i64, scratch_operands = 0 : i64, tpu.core_type = #tpu.core_type<tc>, window_params = [{transform_indices = @transform_0, window_bounds = array<i64: 4096, 128>}, {pipeline_mode = #tpu.pipeline_mode<synchronous>, transform_indices = @transform_1, window_bounds = array<i64: 64, 128>}]} {
    %c0_i32 = arith.constant 0 : i32
    %0 = arith.cmpi eq, %arg0, %c0_i32 : i32
    %1 = arith.extui %0 : i1 to i32
    %c0_i32_0 = arith.constant 0 : i32
    %2 = arith.cmpi ne, %1, %c0_i32_0 : i32
    scf.if %2 {
      %cst_6 = arith.constant 0.000000e+00 : f32
      %9 = vector.broadcast %cst_6 : f32 to vector<64x128xf32>
      %c0_7 = arith.constant 0 : index
      %c0_8 = arith.constant 0 : index
      %10 = vector.load %arg2[%c0_7, %c0_8] : memref<64x128xf32, #tpu.memory_space<vmem>>, vector<64x128xf32>
      tpu.vector_store %arg2[%c0_7, %c0_8], %9 {strides = array<i32>} : memref<64x128xf32, #tpu.memory_space<vmem>>, vector<64x128xf32>,
    } else {
    }
    %c0 = arith.constant 0 : index
    %c0_1 = arith.constant 0 : index
    %3 = vector.load %arg1[%c0, %c0_1] : memref<4096x128xf32, #tpu.memory_space<vmem>>, vector<4096x128xf32>
    %c0_2 = arith.constant 0 : index
    %c0_3 = arith.constant 0 : index
    %4 = vector.load %arg2[%c0_2, %c0_3] : memref<64x128xf32, #tpu.memory_space<vmem>>, vector<64x128xf32>
    %5 = vector.shape_cast %3 : vector<4096x128xf32> to vector<64x64x128xf32>
    %cst = arith.constant dense<0.000000e+00> : vector<64x128xf32>
    %6 = vector.multi_reduction <add>, %5, %cst [0] : vector<64x64x128xf32> to vector<64x128xf32>
    %7 = arith.addf %4, %6 : vector<64x128xf32>
    %c0_4 = arith.constant 0 : index
    %c0_5 = arith.constant 0 : index
    %8 = vector.load %arg2[%c0_4, %c0_5] : memref<64x128xf32, #tpu.memory_space<vmem>>, vector<64x128xf32>
    tpu.vector_store %arg2[%c0_4, %c0_5], %7 {strides = array<i32>} : memref<64x128xf32, #tpu.memory_space<vmem>>, vector<64x128xf32>,
    return
  }
  func.func @transform_0(%arg0: i32) -> (i32, i32) {
    %c0_i32 = arith.constant 0 : i32
    %c0_i32_0 = arith.constant 0 : i32
    return %arg0, %c0_i32 : i32, i32
  }
  func.func @transform_1(%arg0: i32) -> (i32, i32) {
    %c0_i32 = arith.constant 0 : i32
    %c0_i32_0 = arith.constant 0 : i32
    %c0_i32_1 = arith.constant 0 : i32
    return %c0_i32, %c0_i32_0 : i32, i32
  }
}

</mosaic_0001>

<llo_original>
// kernel: tpu_custom_call.1
$region0: #{tpu_custom_call.1}
  #allocation0 [shape = 'u32[]', space=smem, size = 0x4, offset = 0x4, fixed_abs, tag = 'smem constant byte address 0x4 - core index']
  #allocation1 [shape = 'u32[144,128]{1,0:T(1,128)}', space=vmem, size = 0x12000, scoped, tag = 'internal scratch']
  %s0 = inlined_call_operand.hbm [shape: f32[4096,128], index: 0, kind: input, shape index: {}]
  %s1 = inlined_call_operand.hbm [shape: f32[64,128], index: 1, kind: output, shape index: {}]
  %s2 = sld [smem:[#allocation0]]
  $region22: #{tpu_custom_call.1} parent=0
    _
  %s4 = ssub.s32 1, %s2
  %s5 = scalar_select 0, %s4, %s2
  $region1: #{tpu_custom_call.1} parent=0
    #allocation2 [shape = 'u8[2097152]{0}', space=vmem, size = 0x200000, scoped, tag = 'input window, operand 0, single buffered']
    #allocation3 [shape = 's32[1]{0}', space=sflag, size = 0x4, scoped, tag = 'scoped memory for tpu_custom_call.1']
    #allocation4 [shape = 's32[1]{0}', space=sflag, size = 0x4, scoped, tag = 'scoped memory for tpu_custom_call.1']
    #allocation5 [shape = 'u8[32768]{0}', space=vmem, size = 0x8000, scoped, tag = 'output window, operand 0, single buffered']
    %6 = vsyncpa [#allocation3], 0
    %7 = vsyncpa [#allocation4], 0
    // Predicated region
    $region2: #{tpu_custom_call.1} parent=1 // pred_check
      _
    $region3: #{tpu_custom_call.1} parent=1 // pred_check_branch
      %9 = sbr.rel (0) target = $region5
    $region4: #{tpu_custom_call.1} parent=1 // pred_region
      %s11 = ssub.s32 65536, 65536
      %12 = vsyncadd [#allocation3], %s11
      %s13 = sshll.u32 [#allocation2], 4
      %s14 = int_to_ptr.vmem [resolvable:$true] %s13
      %19 = dma.hbm_to_vmem [thread:$0]  %s0, 65536, %s14, [#allocation3], 128, 128, 8
    $region5: #{tpu_custom_call.1} parent=1 // pred_fallthru
      _
    // Predicated region
    $region6: #{tpu_custom_call.1} parent=1 // pred_check
      _
    $region7: #{tpu_custom_call.1} parent=1 // pred_check_branch
      %21 = sbr.rel (0) target = $region9
    $region8: #{tpu_custom_call.1} parent=1 // pred_region
      %22 = dma.done [#allocation3], 65536
    $region9: #{tpu_custom_call.1} parent=1 // pred_fallthru
      _
    %p23 = scmp.eq.s32.totalorder 0, 0
    // Predicated region
    $region10: #{tpu_custom_call.1} parent=1 // pred_check
      %p24 = pneg %p23
    $region11: #{tpu_custom_call.1} parent=1 // pred_check_branch
      %26 = sbr.rel (%p24) target = $region13
    $region12: #{tpu_custom_call.1} parent=1 // pred_region
      %27 = vst [vmem:[#allocation5] sm:$0xff] 0.0
      %28 = vst [vmem:[#allocation5 + $0x8] sm:$0xff] 0.0
      %29 = vst [vmem:[#allocation5 + $0x10] sm:$0xff] 0.0
      %30 = vst [vmem:[#allocation5 + $0x18] sm:$0xff] 0.0
      %31 = vst [vmem:[#allocation5 + $0x20] sm:$0xff] 0.0
      %32 = vst [vmem:[#allocation5 + $0x28] sm:$0xff] 0.0
      %33 = vst [vmem:[#allocation5 + $0x30] sm:$0xff] 0.0
      %34 = vst [vmem:[#allocation5 + $0x38] sm:$0xff] 0.0
    $region13: #{tpu_custom_call.1} parent=1 // pred_fallthru
      _
    %v35 = vld [vmem:[#allocation2] sm:$0xff]
    %v36 = vld [vmem:[#allocation2 + $0x8] sm:$0xff]
    %v37 = vld [vmem:[#allocation2 + $0x10] sm:$0xff]
    %v38 = vld [vmem:[#allocation2 + $0x18] sm:$0xff]
    %v39 = vld [vmem:[#allocation2 + $0x20] sm:$0xff]
    %v40 = vld [vmem:[#allocation2 + $0x28] sm:$0xff]
    %v41 = vld [vmem:[#allocation2 + $0x30] sm:$0xff]
    %v42 = vld [vmem:[#allocation2 + $0x38] sm:$0xff]
    %v43 = vld [vmem:[#allocation2 + $0x40] sm:$0xff]
    %v44 = vld [vmem:[#allocation2 + $0x48] sm:$0xff]
    %v45 = vld [vmem:[#allocation2 + $0x50] sm:$0xff]
    %v46 = vld [vmem:[#allocation2 + $0x58] sm:$0xff]
    %v47 = vld [vmem:[#allocation2 + $0x60] sm:$0xff]
    %v48 = vld [vmem:[#allocation2 + $0x68] sm:$0xff]
    %v49 = vld [vmem:[#allocation2 + $0x70] sm:$0xff]
    %v50 = vld [vmem:[#allocation2 + $0x78] sm:$0xff]
    %v51 = vld [vmem:[#allocation2 + $0x80] sm:$0xff]
    %v52 = vld [vmem:[#allocation2 + $0x88] sm:$0xff]
    %v53 = vld [vmem:[#allocation2 + $0x90] sm:$0xff]
    %v54 = vld [vmem:[#allocation2 + $0x98] sm:$0xff]
    %v55 = vld [vmem:[#allocation2 + $0xa0] sm:$0xff]
    %v56 = vld [vmem:[#allocation2 + $0xa8] sm:$0xff]
    %v57 = vld [vmem:[#allocation2 + $0xb0] sm:$0xff]
    %v58 = vld [vmem:[#allocation2 + $0xb8] sm:$0xff]
    %v59 = vld [vmem:[#allocation2 + $0xc0] sm:$0xff]
    %v60 = vld [vmem:[#allocation2 + $0xc8] sm:$0xff]
    %v61 = vld [vmem:[#allocation2 + $0xd0] sm:$0xff]
    %v62 = vld [vmem:[#allocation2 + $0xd8] sm:$0xff]
    %v63 = vld [vmem:[#allocation2 + $0xe0] sm:$0xff]
    %v64 = vld [vmem:[#allocation2 + $0xe8] sm:$0xff]
    %v65 = vld [vmem:[#allocation2 + $0xf0] sm:$0xff]
    %v66 = vld [vmem:[#allocation2 + $0xf8] sm:$0xff]
    %v67 = vld [vmem:[#allocation2 + $0x100] sm:$0xff]
    %v68 = vld [vmem:[#allocation2 + $0x108] sm:$0xff]
    %v69 = vld [vmem:[#allocation2 + $0x110] sm:$0xff]
    %v70 = vld [vmem:[#allocation2 + $0x118] sm:$0xff]
    %v71 = vld [vmem:[#allocation2 + $0x120] sm:$0xff]
    %v72 = vld [vmem:[#allocation2 + $0x128] sm:$0xff]
    %v73 = vld [vmem:[#allocation2 + $0x130] sm:$0xff]
    %v74 = vld [vmem:[#allocation2 + $0x138] sm:$0xff]
    %v75 = vld [vmem:[#allocation2 + $0x140] sm:$0xff]
    %v76 = vld [vmem:[#allocation2 + $0x148] sm:$0xff]
    %v77 = vld [vmem:[#allocation2 + $0x150] sm:$0xff]
    %v78 = vld [vmem:[#allocation2 + $0x158] sm:$0xff]
    %v79 = vld [vmem:[#allocation2 + $0x160] sm:$0xff]
    %v80 = vld [vmem:[#allocation2 + $0x168] sm:$0xff]
    %v81 = vld [vmem:[#allocation2 + $0x170] sm:$0xff]
    %v82 = vld [vmem:[#allocation2 + $0x178] sm:$0xff]
    %v83 = vld [vmem:[#allocation2 + $0x180] sm:$0xff]
    %v84 = vld [vmem:[#allocation2 + $0x188] sm:$0xff]
    %v85 = vld [vmem:[#allocation2 + $0x190] sm:$0xff]
    %v86 = vld [vmem:[#allocation2 + $0x198] sm:$0xff]
    %v87 = vld [vmem:[#allocation2 + $0x1a0] sm:$0xff]
    %v88 = vld [vmem:[#allocation2 + $0x1a8] sm:$0xff]
    %v89 = vld [vmem:[#allocation2 + $0x1b0] sm:$0xff]
    %v90 = vld [vmem:[#allocation2 + $0x1b8] sm:$0xff]
    %v91 = vld [vmem:[#allocation2 + $0x1c0] sm:$0xff]
    %v92 = vld [vmem:[#allocation2 + $0x1c8] sm:$0xff]
    %v93 = vld [vmem:[#allocation2 + $0x1d0] sm:$0xff]
    %v94 = vld [vmem:[#allocation2 + $0x1d8] sm:$0xff]
    %v95 = vld [vmem:[#allocation2 + $0x1e0] sm:$0xff]
    %v96 = vld [vmem:[#allocation2 + $0x1e8] sm:$0xff]
    %v97 = vld [vmem:[#allocation2 + $0x1f0] sm:$0xff]
    %v98 = vld [vmem:[#allocation2 + $0x1f8] sm:$0xff]
    %v99 = vld [vmem:[#allocation2 + $0x200] sm:$0xff]
    %v100 = vld [vmem:[#allocation2 + $0x208] sm:$0xff]
    %v101 = vld [vmem:[#allocation2 + $0x210] sm:$0xff]
    %v102 = vld [vmem:[#allocation2 + $0x218] sm:$0xff]
    %v103 = vld [vmem:[#allocation2 + $0x220] sm:$0xff]
    %v104 = vld [vmem:[#allocation2 + $0x228] sm:$0xff]
    %v105 = vld [vmem:[#allocation2 + $0x230] sm:$0xff]
    %v106 = vld [vmem:[#allocation2 + $0x238] sm:$0xff]
    %v107 = vld [vmem:[#allocation2 + $0x240] sm:$0xff]
    %v108 = vld [vmem:[#allocation2 + $0x248] sm:$0xff]
    %v109 = vld [vmem:[#allocation2 + $0x250] sm:$0xff]
    %v110 = vld [vmem:[#allocation2 + $0x258] sm:$0xff]
    %v111 = vld [vmem:[#allocation2 + $0x260] sm:$0xff]
    %v112 = vld [vmem:[#allocation2 + $0x268] sm:$0xff]
    %v113 = vld [vmem:[#allocation2 + $0x270] sm:$0xff]
    %v114 = vld [vmem:[#allocation2 + $0x278] sm:$0xff]
    %v115 = vld [vmem:[#allocation2 + $0x280] sm:$0xff]
    %v116 = vld [vmem:[#allocation2 + $0x288] sm:$0xff]
    %v117 = vld [vmem:[#allocation2 + $0x290] sm:$0xff]
    %v118 = vld [vmem:[#allocation2 + $0x298] sm:$0xff]
    %v119 = vld [vmem:[#allocation2 + $0x2a0] sm:$0xff]
    %v120 = vld [vmem:[#allocation2 + $0x2a8] sm:$0xff]
    %v121 = vld [vmem:[#allocation2 + $0x2b0] sm:$0xff]
    %v122 = vld [vmem:[#allocation2 + $0x2b8] sm:$0xff]
    %v123 = vld [vmem:[#allocation2 + $0x2c0] sm:$0xff]
    %v124 = vld [vmem:[#allocation2 + $0x2c8] sm:$0xff]
    %v125 = vld [vmem:[#allocation2 + $0x2d0] sm:$0xff]
    %v126 = vld [vmem:[#allocation2 + $0x2d8] sm:$0xff]
    %v127 = vld [vmem:[#allocation2 + $0x2e0] sm:$0xff]
    %v128 = vld [vmem:[#allocation2 + $0x2e8] sm:$0xff]
    %v129 = vld [vmem:[#allocation2 + $0x2f0] sm:$0xff]
    %v130 = vld [vmem:[#allocation2 + $0x2f8] sm:$0xff]
    %v131 = vld [vmem:[#allocation2 + $0x300] sm:$0xff]
    %v132 = vld [vmem:[#allocation2 + $0x308] sm:$0xff]
    %v133 = vld [vmem:[#allocation2 + $0x310] sm:$0xff]
    %v134 = vld [vmem:[#allocation2 + $0x318] sm:$0xff]
    %v135 = vld [vmem:[#allocation2 + $0x320] sm:$0xff]
    %v136 = vld [vmem:[#allocation2 + $0x328] sm:$0xff]
    %v137 = vld [vmem:[#allocation2 + $0x330] sm:$0xff]
    %v138 = vld [vmem:[#allocation2 + $0x338] sm:$0xff]
    %v139 = vld [vmem:[#allocation2 + $0x340] sm:$0xff]
    %v140 = vld [vmem:[#allocation2 + $0x348] sm:$0xff]
    %v141 = vld [vmem:[#allocation2 + $0x350] sm:$0xff]
    %v142 = vld [vmem:[#allocation2 + $0x358] sm:$0xff]
    %v143 = vld [vmem:[#allocation2 + $0x360] sm:$0xff]
    %v144 = vld [vmem:[#allocation2 + $0x368] sm:$0xff]
    %v145 = vld [vmem:[#allocation2 + $0x370] sm:$0xff]
    %v146 = vld [vmem:[#allocation2 + $0x378] sm:$0xff]
    %v147 = vld [vmem:[#allocation2 + $0x380] sm:$0xff]
    %v148 = vld [vmem:[#allocation2 + $0x388] sm:$0xff]
    %v149 = vld [vmem:[#allocation2 + $0x390] sm:$0xff]
    %v150 = vld [vmem:[#allocation2 + $0x398] sm:$0xff]
    %v151 = vld [vmem:[#allocation2 + $0x3a0] sm:$0xff]
    %v152 = vld [vmem:[#allocation2 + $0x3a8] sm:$0xff]
    %v153 = vld [vmem:[#allocation2 + $0x3b0] sm:$0xff]
    %v154 = vld [vmem:[#allocation2 + $0x3b8] sm:$0xff]
    %v155 = vld [vmem:[#allocation2 + $0x3c0] sm:$0xff]
    %v156 = vld [vmem:[#allocation2 + $0x3c8] sm:$0xff]
    %v157 = vld [vmem:[#allocation2 + $0x3d0] sm:$0xff]
    %v158 = vld [vmem:[#allocation2 + $0x3d8] sm:$0xff]
    %v159 = vld [vmem:[#allocation2 + $0x3e0] sm:$0xff]
    %v160 = vld [vmem:[#allocation2 + $0x3e8] sm:$0xff]
    %v161 = vld [vmem:[#allocation2 + $0x3f0] sm:$0xff]
    %v162 = vld [vmem:[#allocation2 + $0x3f8] sm:$0xff]
    %v163 = vld [vmem:[#allocation2 + $0x400] sm:$0xff]
    %v164 = vld [vmem:[#allocation2 + $0x408] sm:$0xff]
    %v165 = vld [vmem:[#allocation2 + $0x410] sm:$0xff]
    %v166 = vld [vmem:[#allocation2 + $0x418] sm:$0xff]
    %v167 = vld [vmem:[#allocation2 + $0x420] sm:$0xff]
    %v168 = vld [vmem:[#allocation2 + $0x428] sm:$0xff]
    %v169 = vld [vmem:[#allocation2 + $0x430] sm:$0xff]
    %v170 = vld [vmem:[#allocation2 + $0x438] sm:$0xff]
    %v171 = vld [vmem:[#allocation2 + $0x440] sm:$0xff]
    %v172 = vld [vmem:[#allocation2 + $0x448] sm:$0xff]
    %v173 = vld [vmem:[#allocation2 + $0x450] sm:$0xff]
    %v174 = vld [vmem:[#allocation2 + $0x458] sm:$0xff]
    %v175 = vld [vmem:[#allocation2 + $0x460] sm:$0xff]
    %v176 = vld [vmem:[#allocation2 + $0x468] sm:$0xff]
    %v177 = vld [vmem:[#allocation2 + $0x470] sm:$0xff]
    %v178 = vld [vmem:[#allocation2 + $0x478] sm:$0xff]
    %v179 = vld [vmem:[#allocation2 + $0x480] sm:$0xff]
    %v180 = vld [vmem:[#allocation2 + $0x488] sm:$0xff]
    %v181 = vld [vmem:[#allocation2 + $0x490] sm:$0xff]
    %v182 = vld [vmem:[#allocation2 + $0x498] sm:$0xff]
    %v183 = vld [vmem:[#allocation2 + $0x4a0] sm:$0xff]
    %v184 = vld [vmem:[#allocation2 + $0x4a8] sm:$0xff]
    %v185 = vld [vmem:[#allocation2 + $0x4b0] sm:$0xff]
    %v186 = vld [vmem:[#allocation2 + $0x4b8] sm:$0xff]
    %v187 = vld [vmem:[#allocation2 + $0x4c0] sm:$0xff]
    %v188 = vld [vmem:[#allocation2 + $0x4c8] sm:$0xff]
    %v189 = vld [vmem:[#allocation2 + $0x4d0] sm:$0xff]
    %v190 = vld [vmem:[#allocation2 + $0x4d8] sm:$0xff]
    %v191 = vld [vmem:[#allocation2 + $0x4e0] sm:$0xff]
    %v192 = vld [vmem:[#allocation2 + $0x4e8] sm:$0xff]
    %v193 = vld [vmem:[#allocation2 + $0x4f0] sm:$0xff]
    %v194 = vld [vmem:[#allocation2 + $0x4f8] sm:$0xff]
    %v195 = vld [vmem:[#allocation2 + $0x500] sm:$0xff]
    %v196 = vld [vmem:[#allocation2 + $0x508] sm:$0xff]
    %v197 = vld [vmem:[#allocation2 + $0x510] sm:$0xff]
    %v198 = vld [vmem:[#allocation2 + $0x518] sm:$0xff]
    %v199 = vld [vmem:[#allocation2 + $0x520] sm:$0xff]
    %v200 = vld [vmem:[#allocation2 + $0x528] sm:$0xff]
    %v201 = vld [vmem:[#allocation2 + $0x530] sm:$0xff]
    %v202 = vld [vmem:[#allocation2 + $0x538] sm:$0xff]
    %v203 = vld [vmem:[#allocation2 + $0x540] sm:$0xff]
    %v204 = vld [vmem:[#allocation2 + $0x548] sm:$0xff]
    %v205 = vld [vmem:[#allocation2 + $0x550] sm:$0xff]
    %v206 = vld [vmem:[#allocation2 + $0x558] sm:$0xff]
    %v207 = vld [vmem:[#allocation2 + $0x560] sm:$0xff]
    %v208 = vld [vmem:[#allocation2 + $0x568] sm:$0xff]
    %v209 = vld [vmem:[#allocation2 + $0x570] sm:$0xff]
    %v210 = vld [vmem:[#allocation2 + $0x578] sm:$0xff]
    %v211 = vld [vmem:[#allocation2 + $0x580] sm:$0xff]
    %v212 = vld [vmem:[#allocation2 + $0x588] sm:$0xff]
    %v213 = vld [vmem:[#allocation2 + $0x590] sm:$0xff]
    %v214 = vld [vmem:[#allocation2 + $0x598] sm:$0xff]
    %v215 = vld [vmem:[#allocation2 + $0x5a0] sm:$0xff]
    %v216 = vld [vmem:[#allocation2 + $0x5a8] sm:$0xff]
    %v217 = vld [vmem:[#allocation2 + $0x5b0] sm:$0xff]
    %v218 = vld [vmem:[#allocation2 + $0x5b8] sm:$0xff]
    %v219 = vld [vmem:[#allocation2 + $0x5c0] sm:$0xff]
    %v220 = vld [vmem:[#allocation2 + $0x5c8] sm:$0xff]
    %v221 = vld [vmem:[#allocation2 + $0x5d0] sm:$0xff]
    %v222 = vld [vmem:[#allocation2 + $0x5d8] sm:$0xff]
    %v223 = vld [vmem:[#allocation2 + $0x5e0] sm:$0xff]
    %v224 = vld [vmem:[#allocation2 + $0x5e8] sm:$0xff]
    %v225 = vld [vmem:[#allocation2 + $0x5f0] sm:$0xff]
    %v226 = vld [vmem:[#allocation2 + $0x5f8] sm:$0xff]
    %v227 = vld [vmem:[#allocation2 + $0x600] sm:$0xff]
    %v228 = vld [vmem:[#allocation2 + $0x608] sm:$0xff]
    %v229 = vld [vmem:[#allocation2 + $0x610] sm:$0xff]
    %v230 = vld [vmem:[#allocation2 + $0x618] sm:$0xff]
    %v231 = vld [vmem:[#allocation2 + $0x620] sm:$0xff]
    %v232 = vld [vmem:[#allocation2 + $0x628] sm:$0xff]
    %v233 = vld [vmem:[#allocation2 + $0x630] sm:$0xff]
    %v234 = vld [vmem:[#allocation2 + $0x638] sm:$0xff]
    %v235 = vld [vmem:[#allocation2 + $0x640] sm:$0xff]
    %v236 = vld [vmem:[#allocation2 + $0x648] sm:$0xff]
    %v237 = vld [vmem:[#allocation2 + $0x650] sm:$0xff]
    %v238 = vld [vmem:[#allocation2 + $0x658] sm:$0xff]
    %v239 = vld [vmem:[#allocation2 + $0x660] sm:$0xff]
    %v240 = vld [vmem:[#allocation2 + $0x668] sm:$0xff]
    %v241 = vld [vmem:[#allocation2 + $0x670] sm:$0xff]
    %v242 = vld [vmem:[#allocation2 + $0x678] sm:$0xff]
    %v243 = vld [vmem:[#allocation2 + $0x680] sm:$0xff]
    %v244 = vld [vmem:[#allocation2 + $0x688] sm:$0xff]
    %v245 = vld [vmem:[#allocation2 + $0x690] sm:$0xff]
    %v246 = vld [vmem:[#allocation2 + $0x698] sm:$0xff]
    %v247 = vld [vmem:[#allocation2 + $0x6a0] sm:$0xff]
    %v248 = vld [vmem:[#allocation2 + $0x6a8] sm:$0xff]
    %v249 = vld [vmem:[#allocation2 + $0x6b0] sm:$0xff]
    %v250 = vld [vmem:[#allocation2 + $0x6b8] sm:$0xff]
    %v251 = vld [vmem:[#allocation2 + $0x6c0] sm:$0xff]
    %v252 = vld [vmem:[#allocation2 + $0x6c8] sm:$0xff]
    %v253 = vld [vmem:[#allocation2 + $0x6d0] sm:$0xff]
    %v254 = vld [vmem:[#allocation2 + $0x6d8] sm:$0xff]
    %v255 = vld [vmem:[#allocation2 + $0x6e0] sm:$0xff]
    %v256 = vld [vmem:[#allocation2 + $0x6e8] sm:$0xff]
    %v257 = vld [vmem:[#allocation2 + $0x6f0] sm:$0xff]
    %v258 = vld [vmem:[#allocation2 + $0x6f8] sm:$0xff]
    %v259 = vld [vmem:[#allocation2 + $0x700] sm:$0xff]
    %v260 = vld [vmem:[#allocation2 + $0x708] sm:$0xff]
    %v261 = vld [vmem:[#allocation2 + $0x710] sm:$0xff]
    %v262 = vld [vmem:[#allocation2 + $0x718] sm:$0xff]
    %v263 = vld [vmem:[#allocation2 + $0x720] sm:$0xff]
    %v264 = vld [vmem:[#allocation2 + $0x728] sm:$0xff]
    %v265 = vld [vmem:[#allocation2 + $0x730] sm:$0xff]
    %v266 = vld [vmem:[#allocation2 + $0x738] sm:$0xff]
    %v267 = vld [vmem:[#allocation2 + $0x740] sm:$0xff]
    %v268 = vld [vmem:[#allocation2 + $0x748] sm:$0xff]
    %v269 = vld [vmem:[#allocation2 + $0x750] sm:$0xff]
    %v270 = vld [vmem:[#allocation2 + $0x758] sm:$0xff]
    %v271 = vld [vmem:[#allocation2 + $0x760] sm:$0xff]
    %v272 = vld [vmem:[#allocation2 + $0x768] sm:$0xff]
    %v273 = vld [vmem:[#allocation2 + $0x770] sm:$0xff]
    %v274 = vld [vmem:[#allocation2 + $0x778] sm:$0xff]
    %v275 = vld [vmem:[#allocation2 + $0x780] sm:$0xff]
    %v276 = vld [vmem:[#allocation2 + $0x788] sm:$0xff]
    %v277 = vld [vmem:[#allocation2 + $0x790] sm:$0xff]
    %v278 = vld [vmem:[#allocation2 + $0x798] sm:$0xff]
    %v279 = vld [vmem:[#allocation2 + $0x7a0] sm:$0xff]
    %v280 = vld [vmem:[#allocation2 + $0x7a8] sm:$0xff]
    %v281 = vld [vmem:[#allocation2 + $0x7b0] sm:$0xff]
    %v282 = vld [vmem:[#allocation2 + $0x7b8] sm:$0xff]
    %v283 = vld [vmem:[#allocation2 + $0x7c0] sm:$0xff]
    %v284 = vld [vmem:[#allocation2 + $0x7c8] sm:$0xff]
    %v285 = vld [vmem:[#allocation2 + $0x7d0] sm:$0xff]
    %v286 = vld [vmem:[#allocation2 + $0x7d8] sm:$0xff]
    %v287 = vld [vmem:[#allocation2 + $0x7e0] sm:$0xff]
    %v288 = vld [vmem:[#allocation2 + $0x7e8] sm:$0xff]
    %v289 = vld [vmem:[#allocation2 + $0x7f0] sm:$0xff]
    %v290 = vld [vmem:[#allocation2 + $0x7f8] sm:$0xff]
    %v291 = vld [vmem:[#allocation2 + $0x800] sm:$0xff]
    %v292 = vld [vmem:[#allocation2 + $0x808] sm:$0xff]
    %v293 = vld [vmem:[#allocation2 + $0x810] sm:$0xff]
    %v294 = vld [vmem:[#allocation2 + $0x818] sm:$0xff]
    %v295 = vld [vmem:[#allocation2 + $0x820] sm:$0xff]
    %v296 = vld [vmem:[#allocation2 + $0x828] sm:$0xff]
    %v297 = vld [vmem:[#allocation2 + $0x830] sm:$0xff]
    %v298 = vld [vmem:[#allocation2 + $0x838] sm:$0xff]
    %v299 = vld [vmem:[#allocation2 + $0x840] sm:$0xff]
    %v300 = vld [vmem:[#allocation2 + $0x848] sm:$0xff]
    %v301 = vld [vmem:[#allocation2 + $0x850] sm:$0xff]
    %v302 = vld [vmem:[#allocation2 + $0x858] sm:$0xff]
    %v303 = vld [vmem:[#allocation2 + $0x860] sm:$0xff]
    %v304 = vld [vmem:[#allocation2 + $0x868] sm:$0xff]
    %v305 = vld [vmem:[#allocation2 + $0x870] sm:$0xff]
    %v306 = vld [vmem:[#allocation2 + $0x878] sm:$0xff]
    %v307 = vld [vmem:[#allocation2 + $0x880] sm:$0xff]
    %v308 = vld [vmem:[#allocation2 + $0x888] sm:$0xff]
    %v309 = vld [vmem:[#allocation2 + $0x890] sm:$0xff]
    %v310 = vld [vmem:[#allocation2 + $0x898] sm:$0xff]
    %v311 = vld [vmem:[#allocation2 + $0x8a0] sm:$0xff]
    %v312 = vld [vmem:[#allocation2 + $0x8a8] sm:$0xff]
    %v313 = vld [vmem:[#allocation2 + $0x8b0] sm:$0xff]
    %v314 = vld [vmem:[#allocation2 + $0x8b8] sm:$0xff]
    %v315 = vld [vmem:[#allocation2 + $0x8c0] sm:$0xff]
    %v316 = vld [vmem:[#allocation2 + $0x8c8] sm:$0xff]
    %v317 = vld [vmem:[#allocation2 + $0x8d0] sm:$0xff]
    %v318 = vld [vmem:[#allocation2 + $0x8d8] sm:$0xff]
    %v319 = vld [vmem:[#allocation2 + $0x8e0] sm:$0xff]
    %v320 = vld [vmem:[#allocation2 + $0x8e8] sm:$0xff]
    %v321 = vld [vmem:[#allocation2 + $0x8f0] sm:$0xff]
    %v322 = vld [vmem:[#allocation2 + $0x8f8] sm:$0xff]
    %v323 = vld [vmem:[#allocation2 + $0x900] sm:$0xff]
    %v324 = vld [vmem:[#allocation2 + $0x908] sm:$0xff]
    %v325 = vld [vmem:[#allocation2 + $0x910] sm:$0xff]
    %v326 = vld [vmem:[#allocation2 + $0x918] sm:$0xff]
    %v327 = vld [vmem:[#allocation2 + $0x920] sm:$0xff]
    %v328 = vld [vmem:[#allocation2 + $0x928] sm:$0xff]
    %v329 = vld [vmem:[#allocation2 + $0x930] sm:$0xff]
    %v330 = vld [vmem:[#allocation2 + $0x938] sm:$0xff]
    %v331 = vld [vmem:[#allocation2 + $0x940] sm:$0xff]
    %v332 = vld [vmem:[#allocation2 + $0x948] sm:$0xff]
    %v333 = vld [vmem:[#allocation2 + $0x950] sm:$0xff]
    %v334 = vld [vmem:[#allocation2 + $0x958] sm:$0xff]
    %v335 = vld [vmem:[#allocation2 + $0x960] sm:$0xff]
    %v336 = vld [vmem:[#allocation2 + $0x968] sm:$0xff]
    %v337 = vld [vmem:[#allocation2 + $0x970] sm:$0xff]
    %v338 = vld [vmem:[#allocation2 + $0x978] sm:$0xff]
    %v339 = vld [vmem:[#allocation2 + $0x980] sm:$0xff]
    %v340 = vld [vmem:[#allocation2 + $0x988] sm:$0xff]
    %v341 = vld [vmem:[#allocation2 + $0x990] sm:$0xff]
    %v342 = vld [vmem:[#allocation2 + $0x998] sm:$0xff]
    %v343 = vld [vmem:[#allocation2 + $0x9a0] sm:$0xff]
    %v344 = vld [vmem:[#allocation2 + $0x9a8] sm:$0xff]
    %v345 = vld [vmem:[#allocation2 + $0x9b0] sm:$0xff]
    %v346 = vld [vmem:[#allocation2 + $0x9b8] sm:$0xff]
    %v347 = vld [vmem:[#allocation2 + $0x9c0] sm:$0xff]
    %v348 = vld [vmem:[#allocation2 + $0x9c8] sm:$0xff]
    %v349 = vld [vmem:[#allocation2 + $0x9d0] sm:$0xff]
    %v350 = vld [vmem:[#allocation2 + $0x9d8] sm:$0xff]
    %v351 = vld [vmem:[#allocation2 + $0x9e0] sm:$0xff]
    %v352 = vld [vmem:[#allocation2 + $0x9e8] sm:$0xff]
    %v353 = vld [vmem:[#allocation2 + $0x9f0] sm:$0xff]
    %v354 = vld [vmem:[#allocation2 + $0x9f8] sm:$0xff]
    %v355 = vld [vmem:[#allocation2 + $0xa00] sm:$0xff]
    %v356 = vld [vmem:[#allocation2 + $0xa08] sm:$0xff]
    %v357 = vld [vmem:[#allocation2 + $0xa10] sm:$0xff]
    %v358 = vld [vmem:[#allocation2 + $0xa18] sm:$0xff]
    %v359 = vld [vmem:[#allocation2 + $0xa20] sm:$0xff]
    %v360 = vld [vmem:[#allocation2 + $0xa28] sm:$0xff]
    %v361 = vld [vmem:[#allocation2 + $0xa30] sm:$0xff]
    %v362 = vld [vmem:[#allocation2 + $0xa38] sm:$0xff]
    %v363 = vld [vmem:[#allocation2 + $0xa40] sm:$0xff]
    %v364 = vld [vmem:[#allocation2 + $0xa48] sm:$0xff]
    %v365 = vld [vmem:[#allocation2 + $0xa50] sm:$0xff]
    %v366 = vld [vmem:[#allocation2 + $0xa58] sm:$0xff]
    %v367 = vld [vmem:[#allocation2 + $0xa60] sm:$0xff]
    %v368 = vld [vmem:[#allocation2 + $0xa68] sm:$0xff]
    %v369 = vld [vmem:[#allocation2 + $0xa70] sm:$0xff]
    %v370 = vld [vmem:[#allocation2 + $0xa78] sm:$0xff]
    %v371 = vld [vmem:[#allocation2 + $0xa80] sm:$0xff]
    %v372 = vld [vmem:[#allocation2 + $0xa88] sm:$0xff]
    %v373 = vld [vmem:[#allocation2 + $0xa90] sm:$0xff]
    %v374 = vld [vmem:[#allocation2 + $0xa98] sm:$0xff]
    %v375 = vld [vmem:[#allocation2 + $0xaa0] sm:$0xff]
    %v376 = vld [vmem:[#allocation2 + $0xaa8] sm:$0xff]
    %v377 = vld [vmem:[#allocation2 + $0xab0] sm:$0xff]
    %v378 = vld [vmem:[#allocation2 + $0xab8] sm:$0xff]
    %v379 = vld [vmem:[#allocation2 + $0xac0] sm:$0xff]
    %v380 = vld [vmem:[#allocation2 + $0xac8] sm:$0xff]
    %v381 = vld [vmem:[#allocation2 + $0xad0] sm:$0xff]
    %v382 = vld [vmem:[#allocation2 + $0xad8] sm:$0xff]
    %v383 = vld [vmem:[#allocation2 + $0xae0] sm:$0xff]
    %v384 = vld [vmem:[#allocation2 + $0xae8] sm:$0xff]
    %v385 = vld [vmem:[#allocation2 + $0xaf0] sm:$0xff]
    %v386 = vld [vmem:[#allocation2 + $0xaf8] sm:$0xff]
    %v387 = vld [vmem:[#allocation2 + $0xb00] sm:$0xff]
    %v388 = vld [vmem:[#allocation2 + $0xb08] sm:$0xff]
    %v389 = vld [vmem:[#allocation2 + $0xb10] sm:$0xff]
    %v390 = vld [vmem:[#allocation2 + $0xb18] sm:$0xff]
    %v391 = vld [vmem:[#allocation2 + $0xb20] sm:$0xff]
    %v392 = vld [vmem:[#allocation2 + $0xb28] sm:$0xff]
    %v393 = vld [vmem:[#allocation2 + $0xb30] sm:$0xff]
    %v394 = vld [vmem:[#allocation2 + $0xb38] sm:$0xff]
    %v395 = vld [vmem:[#allocation2 + $0xb40] sm:$0xff]
    %v396 = vld [vmem:[#allocation2 + $0xb48] sm:$0xff]
    %v397 = vld [vmem:[#allocation2 + $0xb50] sm:$0xff]
    %v398 = vld [vmem:[#allocation2 + $0xb58] sm:$0xff]
    %v399 = vld [vmem:[#allocation2 + $0xb60] sm:$0xff]
    %v400 = vld [vmem:[#allocation2 + $0xb68] sm:$0xff]
    %v401 = vld [vmem:[#allocation2 + $0xb70] sm:$0xff]
    %v402 = vld [vmem:[#allocation2 + $0xb78] sm:$0xff]
    %v403 = vld [vmem:[#allocation2 + $0xb80] sm:$0xff]
    %v404 = vld [vmem:[#allocation2 + $0xb88] sm:$0xff]
    %v405 = vld [vmem:[#allocation2 + $0xb90] sm:$0xff]
    %v406 = vld [vmem:[#allocation2 + $0xb98] sm:$0xff]
    %v407 = vld [vmem:[#allocation2 + $0xba0] sm:$0xff]
    %v408 = vld [vmem:[#allocation2 + $0xba8] sm:$0xff]
    %v409 = vld [vmem:[#allocation2 + $0xbb0] sm:$0xff]
    %v410 = vld [vmem:[#allocation2 + $0xbb8] sm:$0xff]
    %v411 = vld [vmem:[#allocation2 + $0xbc0] sm:$0xff]
    %v412 = vld [vmem:[#allocation2 + $0xbc8] sm:$0xff]
    %v413 = vld [vmem:[#allocation2 + $0xbd0] sm:$0xff]
    %v414 = vld [vmem:[#allocation2 + $0xbd8] sm:$0xff]
    %v415 = vld [vmem:[#allocation2 + $0xbe0] sm:$0xff]
    %v416 = vld [vmem:[#allocation2 + $0xbe8] sm:$0xff]
    %v417 = vld [vmem:[#allocation2 + $0xbf0] sm:$0xff]
    %v418 = vld [vmem:[#allocation2 + $0xbf8] sm:$0xff]
    %v419 = vld [vmem:[#allocation2 + $0xc00] sm:$0xff]
    %v420 = vld [vmem:[#allocation2 + $0xc08] sm:$0xff]
    %v421 = vld [vmem:[#allocation2 + $0xc10] sm:$0xff]
    %v422 = vld [vmem:[#allocation2 + $0xc18] sm:$0xff]
    %v423 = vld [vmem:[#allocation2 + $0xc20] sm:$0xff]
    %v424 = vld [vmem:[#allocation2 + $0xc28] sm:$0xff]
    %v425 = vld [vmem:[#allocation2 + $0xc30] sm:$0xff]
    %v426 = vld [vmem:[#allocation2 + $0xc38] sm:$0xff]
    %v427 = vld [vmem:[#allocation2 + $0xc40] sm:$0xff]
    %v428 = vld [vmem:[#allocation2 + $0xc48] sm:$0xff]
    %v429 = vld [vmem:[#allocation2 + $0xc50] sm:$0xff]
    %v430 = vld [vmem:[#allocation2 + $0xc58] sm:$0xff]
    %v431 = vld [vmem:[#allocation2 + $0xc60] sm:$0xff]
    %v432 = vld [vmem:[#allocation2 + $0xc68] sm:$0xff]
    %v433 = vld [vmem:[#allocation2 + $0xc70] sm:$0xff]
    %v434 = vld [vmem:[#allocation2 + $0xc78] sm:$0xff]
    %v435 = vld [vmem:[#allocation2 + $0xc80] sm:$0xff]
    %v436 = vld [vmem:[#allocation2 + $0xc88] sm:$0xff]
    %v437 = vld [vmem:[#allocation2 + $0xc90] sm:$0xff]
    %v438 = vld [vmem:[#allocation2 + $0xc98] sm:$0xff]
    %v439 = vld [vmem:[#allocation2 + $0xca0] sm:$0xff]
    %v440 = vld [vmem:[#allocation2 + $0xca8] sm:$0xff]
    %v441 = vld [vmem:[#allocation2 + $0xcb0] sm:$0xff]
    %v442 = vld [vmem:[#allocation2 + $0xcb8] sm:$0xff]
    %v443 = vld [vmem:[#allocation2 + $0xcc0] sm:$0xff]
    %v444 = vld [vmem:[#allocation2 + $0xcc8] sm:$0xff]
    %v445 = vld [vmem:[#allocation2 + $0xcd0] sm:$0xff]
    %v446 = vld [vmem:[#allocation2 + $0xcd8] sm:$0xff]
    %v447 = vld [vmem:[#allocation2 + $0xce0] sm:$0xff]
    %v448 = vld [vmem:[#allocation2 + $0xce8] sm:$0xff]
    %v449 = vld [vmem:[#allocation2 + $0xcf0] sm:$0xff]
    %v450 = vld [vmem:[#allocation2 + $0xcf8] sm:$0xff]
    %v451 = vld [vmem:[#allocation2 + $0xd00] sm:$0xff]
    %v452 = vld [vmem:[#allocation2 + $0xd08] sm:$0xff]
    %v453 = vld [vmem:[#allocation2 + $0xd10] sm:$0xff]
    %v454 = vld [vmem:[#allocation2 + $0xd18] sm:$0xff]
    %v455 = vld [vmem:[#allocation2 + $0xd20] sm:$0xff]
    %v456 = vld [vmem:[#allocation2 + $0xd28] sm:$0xff]
    %v457 = vld [vmem:[#allocation2 + $0xd30] sm:$0xff]
    %v458 = vld [vmem:[#allocation2 + $0xd38] sm:$0xff]
    %v459 = vld [vmem:[#allocation2 + $0xd40] sm:$0xff]
    %v460 = vld [vmem:[#allocation2 + $0xd48] sm:$0xff]
    %v461 = vld [vmem:[#allocation2 + $0xd50] sm:$0xff]
    %v462 = vld [vmem:[#allocation2 + $0xd58] sm:$0xff]
    %v463 = vld [vmem:[#allocation2 + $0xd60] sm:$0xff]
    %v464 = vld [vmem:[#allocation2 + $0xd68] sm:$0xff]
    %v465 = vld [vmem:[#allocation2 + $0xd70] sm:$0xff]
    %v466 = vld [vmem:[#allocation2 + $0xd78] sm:$0xff]
    %v467 = vld [vmem:[#allocation2 + $0xd80] sm:$0xff]
    %v468 = vld [vmem:[#allocation2 + $0xd88] sm:$0xff]
    %v469 = vld [vmem:[#allocation2 + $0xd90] sm:$0xff]
    %v470 = vld [vmem:[#allocation2 + $0xd98] sm:$0xff]
    %v471 = vld [vmem:[#allocation2 + $0xda0] sm:$0xff]
    %v472 = vld [vmem:[#allocation2 + $0xda8] sm:$0xff]
    %v473 = vld [vmem:[#allocation2 + $0xdb0] sm:$0xff]
    %v474 = vld [vmem:[#allocation2 + $0xdb8] sm:$0xff]
    %v475 = vld [vmem:[#allocation2 + $0xdc0] sm:$0xff]
    %v476 = vld [vmem:[#allocation2 + $0xdc8] sm:$0xff]
    %v477 = vld [vmem:[#allocation2 + $0xdd0] sm:$0xff]
    %v478 = vld [vmem:[#allocation2 + $0xdd8] sm:$0xff]
    %v479 = vld [vmem:[#allocation2 + $0xde0] sm:$0xff]
    %v480 = vld [vmem:[#allocation2 + $0xde8] sm:$0xff]
    %v481 = vld [vmem:[#allocation2 + $0xdf0] sm:$0xff]
    %v482 = vld [vmem:[#allocation2 + $0xdf8] sm:$0xff]
    %v483 = vld [vmem:[#allocation2 + $0xe00] sm:$0xff]
    %v484 = vld [vmem:[#allocation2 + $0xe08] sm:$0xff]
    %v485 = vld [vmem:[#allocation2 + $0xe10] sm:$0xff]
    %v486 = vld [vmem:[#allocation2 + $0xe18] sm:$0xff]
    %v487 = vld [vmem:[#allocation2 + $0xe20] sm:$0xff]
    %v488 = vld [vmem:[#allocation2 + $0xe28] sm:$0xff]
    %v489 = vld [vmem:[#allocation2 + $0xe30] sm:$0xff]
    %v490 = vld [vmem:[#allocation2 + $0xe38] sm:$0xff]
    %v491 = vld [vmem:[#allocation2 + $0xe40] sm:$0xff]
    %v492 = vld [vmem:[#allocation2 + $0xe48] sm:$0xff]
    %v493 = vld [vmem:[#allocation2 + $0xe50] sm:$0xff]
    %v494 = vld [vmem:[#allocation2 + $0xe58] sm:$0xff]
    %v495 = vld [vmem:[#allocation2 + $0xe60] sm:$0xff]
    %v496 = vld [vmem:[#allocation2 + $0xe68] sm:$0xff]
    %v497 = vld [vmem:[#allocation2 + $0xe70] sm:$0xff]
    %v498 = vld [vmem:[#allocation2 + $0xe78] sm:$0xff]
    %v499 = vld [vmem:[#allocation2 + $0xe80] sm:$0xff]
    %v500 = vld [vmem:[#allocation2 + $0xe88] sm:$0xff]
    %v501 = vld [vmem:[#allocation2 + $0xe90] sm:$0xff]
    %v502 = vld [vmem:[#allocation2 + $0xe98] sm:$0xff]
    %v503 = vld [vmem:[#allocation2 + $0xea0] sm:$0xff]
    %v504 = vld [vmem:[#allocation2 + $0xea8] sm:$0xff]
    %v505 = vld [vmem:[#allocation2 + $0xeb0] sm:$0xff]
    %v506 = vld [vmem:[#allocation2 + $0xeb8] sm:$0xff]
    %v507 = vld [vmem:[#allocation2 + $0xec0] sm:$0xff]
    %v508 = vld [vmem:[#allocation2 + $0xec8] sm:$0xff]
    %v509 = vld [vmem:[#allocation2 + $0xed0] sm:$0xff]
    %v510 = vld [vmem:[#allocation2 + $0xed8] sm:$0xff]
    %v511 = vld [vmem:[#allocation2 + $0xee0] sm:$0xff]
    %v512 = vld [vmem:[#allocation2 + $0xee8] sm:$0xff]
    %v513 = vld [vmem:[#allocation2 + $0xef0] sm:$0xff]
    %v514 = vld [vmem:[#allocation2 + $0xef8] sm:$0xff]
    %v515 = vld [vmem:[#allocation2 + $0xf00] sm:$0xff]
    %v516 = vld [vmem:[#allocation2 + $0xf08] sm:$0xff]
    %v517 = vld [vmem:[#allocation2 + $0xf10] sm:$0xff]
    %v518 = vld [vmem:[#allocation2 + $0xf18] sm:$0xff]
    %v519 = vld [vmem:[#allocation2 + $0xf20] sm:$0xff]
    %v520 = vld [vmem:[#allocation2 + $0xf28] sm:$0xff]
    %v521 = vld [vmem:[#allocation2 + $0xf30] sm:$0xff]
    %v522 = vld [vmem:[#allocation2 + $0xf38] sm:$0xff]
    %v523 = vld [vmem:[#allocation2 + $0xf40] sm:$0xff]
    %v524 = vld [vmem:[#allocation2 + $0xf48] sm:$0xff]
    %v525 = vld [vmem:[#allocation2 + $0xf50] sm:$0xff]
    %v526 = vld [vmem:[#allocation2 + $0xf58] sm:$0xff]
    %v527 = vld [vmem:[#allocation2 + $0xf60] sm:$0xff]
    %v528 = vld [vmem:[#allocation2 + $0xf68] sm:$0xff]
    %v529 = vld [vmem:[#allocation2 + $0xf70] sm:$0xff]
    %v530 = vld [vmem:[#allocation2 + $0xf78] sm:$0xff]
    %v531 = vld [vmem:[#allocation2 + $0xf80] sm:$0xff]
    %v532 = vld [vmem:[#allocation2 + $0xf88] sm:$0xff]
    %v533 = vld [vmem:[#allocation2 + $0xf90] sm:$0xff]
    %v534 = vld [vmem:[#allocation2 + $0xf98] sm:$0xff]
    %v535 = vld [vmem:[#allocation2 + $0xfa0] sm:$0xff]
    %v536 = vld [vmem:[#allocation2 + $0xfa8] sm:$0xff]
    %v537 = vld [vmem:[#allocation2 + $0xfb0] sm:$0xff]
    %v538 = vld [vmem:[#allocation2 + $0xfb8] sm:$0xff]
    %v539 = vld [vmem:[#allocation2 + $0xfc0] sm:$0xff]
    %v540 = vld [vmem:[#allocation2 + $0xfc8] sm:$0xff]
    %v541 = vld [vmem:[#allocation2 + $0xfd0] sm:$0xff]
    %v542 = vld [vmem:[#allocation2 + $0xfd8] sm:$0xff]
    %v543 = vld [vmem:[#allocation2 + $0xfe0] sm:$0xff]
    %v544 = vld [vmem:[#allocation2 + $0xfe8] sm:$0xff]
    %v545 = vld [vmem:[#allocation2 + $0xff0] sm:$0xff]
    %v546 = vld [vmem:[#allocation2 + $0xff8] sm:$0xff]
    %v547 = vld [vmem:[#allocation5] sm:$0xff]
    %v548 = vld [vmem:[#allocation5 + $0x8] sm:$0xff]
    %v549 = vld [vmem:[#allocation5 + $0x10] sm:$0xff]
    %v550 = vld [vmem:[#allocation5 + $0x18] sm:$0xff]
    %v551 = vld [vmem:[#allocation5 + $0x20] sm:$0xff]
    %v552 = vld [vmem:[#allocation5 + $0x28] sm:$0xff]
    %v553 = vld [vmem:[#allocation5 + $0x30] sm:$0xff]
    %v554 = vld [vmem:[#allocation5 + $0x38] sm:$0xff]
    %v555 = vadd.f32 %v35, %v43
    %v556 = vadd.f32 %v555, %v51
    %v557 = vadd.f32 %v556, %v59
    %v558 = vadd.f32 %v557, %v67
    %v559 = vadd.f32 %v558, %v75
    %v560 = vadd.f32 %v559, %v83
    %v561 = vadd.f32 %v560, %v91
    %v562 = vadd.f32 %v561, %v99
    %v563 = vadd.f32 %v562, %v107
    %v564 = vadd.f32 %v563, %v115
    %v565 = vadd.f32 %v564, %v123
    %v566 = vadd.f32 %v565, %v131
    %v567 = vadd.f32 %v566, %v139
    %v568 = vadd.f32 %v567, %v147
    %v569 = vadd.f32 %v568, %v155
    %v570 = vadd.f32 %v569, %v163
    %v571 = vadd.f32 %v570, %v171
    %v572 = vadd.f32 %v571, %v179
    %v573 = vadd.f32 %v572, %v187
    %v574 = vadd.f32 %v573, %v195
    %v575 = vadd.f32 %v574, %v203
    %v576 = vadd.f32 %v575, %v211
    %v577 = vadd.f32 %v576, %v219
    %v578 = vadd.f32 %v577, %v227
    %v579 = vadd.f32 %v578, %v235
    %v580 = vadd.f32 %v579, %v243
    %v581 = vadd.f32 %v580, %v251
    %v582 = vadd.f32 %v581, %v259
    %v583 = vadd.f32 %v582, %v267
    %v584 = vadd.f32 %v583, %v275
    %v585 = vadd.f32 %v584, %v283
    %v586 = vadd.f32 %v585, %v291
    %v587 = vadd.f32 %v586, %v299
    %v588 = vadd.f32 %v587, %v307
    %v589 = vadd.f32 %v588, %v315
    %v590 = vadd.f32 %v589, %v323
    %v591 = vadd.f32 %v590, %v331
    %v592 = vadd.f32 %v591, %v339
    %v593 = vadd.f32 %v592, %v347
    %v594 = vadd.f32 %v593, %v355
    %v595 = vadd.f32 %v594, %v363
    %v596 = vadd.f32 %v595, %v371
    %v597 = vadd.f32 %v596, %v379
    %v598 = vadd.f32 %v597, %v387
    %v599 = vadd.f32 %v598, %v395
    %v600 = vadd.f32 %v599, %v403
    %v601 = vadd.f32 %v600, %v411
    %v602 = vadd.f32 %v601, %v419
    %v603 = vadd.f32 %v602, %v427
    %v604 = vadd.f32 %v603, %v435
    %v605 = vadd.f32 %v604, %v443
    %v606 = vadd.f32 %v605, %v451
    %v607 = vadd.f32 %v606, %v459
    %v608 = vadd.f32 %v607, %v467
    %v609 = vadd.f32 %v608, %v475
    %v610 = vadd.f32 %v609, %v483
    %v611 = vadd.f32 %v610, %v491
    %v612 = vadd.f32 %v611, %v499
    %v613 = vadd.f32 %v612, %v507
    %v614 = vadd.f32 %v613, %v515
    %v615 = vadd.f32 %v614, %v523
    %v616 = vadd.f32 %v615, %v531
    %v617 = vadd.f32 %v616, %v539
    %v618 = vadd.f32 %v36, %v44
    %v619 = vadd.f32 %v618, %v52
    %v620 = vadd.f32 %v619, %v60
    %v621 = vadd.f32 %v620, %v68
    %v622 = vadd.f32 %v621, %v76
    %v623 = vadd.f32 %v622, %v84
    %v624 = vadd.f32 %v623, %v92
    %v625 = vadd.f32 %v624, %v100
    %v626 = vadd.f32 %v625, %v108
    %v627 = vadd.f32 %v626, %v116
    %v628 = vadd.f32 %v627, %v124
    %v629 = vadd.f32 %v628, %v132
    %v630 = vadd.f32 %v629, %v140
    %v631 = vadd.f32 %v630, %v148
    %v632 = vadd.f32 %v631, %v156
    %v633 = vadd.f32 %v632, %v164
    %v634 = vadd.f32 %v633, %v172
    %v635 = vadd.f32 %v634, %v180
    %v636 = vadd.f32 %v635, %v188
    %v637 = vadd.f32 %v636, %v196
    %v638 = vadd.f32 %v637, %v204
    %v639 = vadd.f32 %v638, %v212
    %v640 = vadd.f32 %v639, %v220
    %v641 = vadd.f32 %v640, %v228
    %v642 = vadd.f32 %v641, %v236
    %v643 = vadd.f32 %v642, %v244
    %v644 = vadd.f32 %v643, %v252
    %v645 = vadd.f32 %v644, %v260
    %v646 = vadd.f32 %v645, %v268
    %v647 = vadd.f32 %v646, %v276
    %v648 = vadd.f32 %v647, %v284
    %v649 = vadd.f32 %v648, %v292
    %v650 = vadd.f32 %v649, %v300
    %v651 = vadd.f32 %v650, %v308
    %v652 = vadd.f32 %v651, %v316
    %v653 = vadd.f32 %v652, %v324
    %v654 = vadd.f32 %v653, %v332
    %v655 = vadd.f32 %v654, %v340
    %v656 = vadd.f32 %v655, %v348
    %v657 = vadd.f32 %v656, %v356
    %v658 = vadd.f32 %v657, %v364
    %v659 = vadd.f32 %v658, %v372
    %v660 = vadd.f32 %v659, %v380
    %v661 = vadd.f32 %v660, %v388
    %v662 = vadd.f32 %v661, %v396
    %v663 = vadd.f32 %v662, %v404
    %v664 = vadd.f32 %v663, %v412
    %v665 = vadd.f32 %v664, %v420
    %v666 = vadd.f32 %v665, %v428
    %v667 = vadd.f32 %v666, %v436
    %v668 = vadd.f32 %v667, %v444
    %v669 = vadd.f32 %v668, %v452
    %v670 = vadd.f32 %v669, %v460
    %v671 = vadd.f32 %v670, %v468
    %v672 = vadd.f32 %v671, %v476
    %v673 = vadd.f32 %v672, %v484
    %v674 = vadd.f32 %v673, %v492
    %v675 = vadd.f32 %v674, %v500
    %v676 = vadd.f32 %v675, %v508
    %v677 = vadd.f32 %v676, %v516
    %v678 = vadd.f32 %v677, %v524
    %v679 = vadd.f32 %v678, %v532
    %v680 = vadd.f32 %v679, %v540
    %v681 = vadd.f32 %v37, %v45
    %v682 = vadd.f32 %v681, %v53
    %v683 = vadd.f32 %v682, %v61
    %v684 = vadd.f32 %v683, %v69
    %v685 = vadd.f32 %v684, %v77
    %v686 = vadd.f32 %v685, %v85
    %v687 = vadd.f32 %v686, %v93
    %v688 = vadd.f32 %v687, %v101
    %v689 = vadd.f32 %v688, %v109
    %v690 = vadd.f32 %v689, %v117
    %v691 = vadd.f32 %v690, %v125
    %v692 = vadd.f32 %v691, %v133
    %v693 = vadd.f32 %v692, %v141
    %v694 = vadd.f32 %v693, %v149
    %v695 = vadd.f32 %v694, %v157
    %v696 = vadd.f32 %v695, %v165
    %v697 = vadd.f32 %v696, %v173
    %v698 = vadd.f32 %v697, %v181
    %v699 = vadd.f32 %v698, %v189
    %v700 = vadd.f32 %v699, %v197
    %v701 = vadd.f32 %v700, %v205
    %v702 = vadd.f32 %v701, %v213
    %v703 = vadd.f32 %v702, %v221
    %v704 = vadd.f32 %v703, %v229
    %v705 = vadd.f32 %v704, %v237
    %v706 = vadd.f32 %v705, %v245
    %v707 = vadd.f32 %v706, %v253
    %v708 = vadd.f32 %v707, %v261
    %v709 = vadd.f32 %v708, %v269
    %v710 = vadd.f32 %v709, %v277
    %v711 = vadd.f32 %v710, %v285
    %v712 = vadd.f32 %v711, %v293
    %v713 = vadd.f32 %v712, %v301
    %v714 = vadd.f32 %v713, %v309
    %v715 = vadd.f32 %v714, %v317
    %v716 = vadd.f32 %v715, %v325
    %v717 = vadd.f32 %v716, %v333
    %v718 = vadd.f32 %v717, %v341
    %v719 = vadd.f32 %v718, %v349
    %v720 = vadd.f32 %v719, %v357
    %v721 = vadd.f32 %v720, %v365
    %v722 = vadd.f32 %v721, %v373
    %v723 = vadd.f32 %v722, %v381
    %v724 = vadd.f32 %v723, %v389
    %v725 = vadd.f32 %v724, %v397
    %v726 = vadd.f32 %v725, %v405
    %v727 = vadd.f32 %v726, %v413
    %v728 = vadd.f32 %v727, %v421
    %v729 = vadd.f32 %v728, %v429
    %v730 = vadd.f32 %v729, %v437
    %v731 = vadd.f32 %v730, %v445
    %v732 = vadd.f32 %v731, %v453
    %v733 = vadd.f32 %v732, %v461
    %v734 = vadd.f32 %v733, %v469
    %v735 = vadd.f32 %v734, %v477
    %v736 = vadd.f32 %v735, %v485
    %v737 = vadd.f32 %v736, %v493
    %v738 = vadd.f32 %v737, %v501
    %v739 = vadd.f32 %v738, %v509
    %v740 = vadd.f32 %v739, %v517
    %v741 = vadd.f32 %v740, %v525
    %v742 = vadd.f32 %v741, %v533
    %v743 = vadd.f32 %v742, %v541
    %v744 = vadd.f32 %v38, %v46
    %v745 = vadd.f32 %v744, %v54
    %v746 = vadd.f32 %v745, %v62
    %v747 = vadd.f32 %v746, %v70
    %v748 = vadd.f32 %v747, %v78
    %v749 = vadd.f32 %v748, %v86
    %v750 = vadd.f32 %v749, %v94
    %v751 = vadd.f32 %v750, %v102
    %v752 = vadd.f32 %v751, %v110
    %v753 = vadd.f32 %v752, %v118
    %v754 = vadd.f32 %v753, %v126
    %v755 = vadd.f32 %v754, %v134
    %v756 = vadd.f32 %v755, %v142
    %v757 = vadd.f32 %v756, %v150
    %v758 = vadd.f32 %v757, %v158
    %v759 = vadd.f32 %v758, %v166
    %v760 = vadd.f32 %v759, %v174
    %v761 = vadd.f32 %v760, %v182
    %v762 = vadd.f32 %v761, %v190
    %v763 = vadd.f32 %v762, %v198
    %v764 = vadd.f32 %v763, %v206
    %v765 = vadd.f32 %v764, %v214
    %v766 = vadd.f32 %v765, %v222
    %v767 = vadd.f32 %v766, %v230
    %v768 = vadd.f32 %v767, %v238
    %v769 = vadd.f32 %v768, %v246
    %v770 = vadd.f32 %v769, %v254
    %v771 = vadd.f32 %v770, %v262
    %v772 = vadd.f32 %v771, %v270
    %v773 = vadd.f32 %v772, %v278
    %v774 = vadd.f32 %v773, %v286
    %v775 = vadd.f32 %v774, %v294
    %v776 = vadd.f32 %v775, %v302
    %v777 = vadd.f32 %v776, %v310
    %v778 = vadd.f32 %v777, %v318
    %v779 = vadd.f32 %v778, %v326
    %v780 = vadd.f32 %v779, %v334
    %v781 = vadd.f32 %v780, %v342
    %v782 = vadd.f32 %v781, %v350
    %v783 = vadd.f32 %v782, %v358
    %v784 = vadd.f32 %v783, %v366
    %v785 = vadd.f32 %v784, %v374
    %v786 = vadd.f32 %v785, %v382
    %v787 = vadd.f32 %v786, %v390
    %v788 = vadd.f32 %v787, %v398
    %v789 = vadd.f32 %v788, %v406
    %v790 = vadd.f32 %v789, %v414
    %v791 = vadd.f32 %v790, %v422
    %v792 = vadd.f32 %v791, %v430
    %v793 = vadd.f32 %v792, %v438
    %v794 = vadd.f32 %v793, %v446
    %v795 = vadd.f32 %v794, %v454
    %v796 = vadd.f32 %v795, %v462
    %v797 = vadd.f32 %v796, %v470
    %v798 = vadd.f32 %v797, %v478
    %v799 = vadd.f32 %v798, %v486
    %v800 = vadd.f32 %v799, %v494
    %v801 = vadd.f32 %v800, %v502
    %v802 = vadd.f32 %v801, %v510
    %v803 = vadd.f32 %v802, %v518
    %v804 = vadd.f32 %v803, %v526
    %v805 = vadd.f32 %v804, %v534
    %v806 = vadd.f32 %v805, %v542
    %v807 = vadd.f32 %v39, %v47
    %v808 = vadd.f32 %v807, %v55
    %v809 = vadd.f32 %v808, %v63
    %v810 = vadd.f32 %v809, %v71
    %v811 = vadd.f32 %v810, %v79
    %v812 = vadd.f32 %v811, %v87
    %v813 = vadd.f32 %v812, %v95
    %v814 = vadd.f32 %v813, %v103
    %v815 = vadd.f32 %v814, %v111
    %v816 = vadd.f32 %v815, %v119
    %v817 = vadd.f32 %v816, %v127
    %v818 = vadd.f32 %v817, %v135
    %v819 = vadd.f32 %v818, %v143
    %v820 = vadd.f32 %v819, %v151
    %v821 = vadd.f32 %v820, %v159
    %v822 = vadd.f32 %v821, %v167
    %v823 = vadd.f32 %v822, %v175
    %v824 = vadd.f32 %v823, %v183
    %v825 = vadd.f32 %v824, %v191
    %v826 = vadd.f32 %v825, %v199
    %v827 = vadd.f32 %v826, %v207
    %v828 = vadd.f32 %v827, %v215
    %v829 = vadd.f32 %v828, %v223
    %v830 = vadd.f32 %v829, %v231
    %v831 = vadd.f32 %v830, %v239
    %v832 = vadd.f32 %v831, %v247
    %v833 = vadd.f32 %v832, %v255
    %v834 = vadd.f32 %v833, %v263
    %v835 = vadd.f32 %v834, %v271
    %v836 = vadd.f32 %v835, %v279
    %v837 = vadd.f32 %v836, %v287
    %v838 = vadd.f32 %v837, %v295
    %v839 = vadd.f32 %v838, %v303
    %v840 = vadd.f32 %v839, %v311
    %v841 = vadd.f32 %v840, %v319
    %v842 = vadd.f32 %v841, %v327
    %v843 = vadd.f32 %v842, %v335
    %v844 = vadd.f32 %v843, %v343
    %v845 = vadd.f32 %v844, %v351
    %v846 = vadd.f32 %v845, %v359
    %v847 = vadd.f32 %v846, %v367
    %v848 = vadd.f32 %v847, %v375
    %v849 = vadd.f32 %v848, %v383
    %v850 = vadd.f32 %v849, %v391
    %v851 = vadd.f32 %v850, %v399
    %v852 = vadd.f32 %v851, %v407
    %v853 = vadd.f32 %v852, %v415
    %v854 = vadd.f32 %v853, %v423
    %v855 = vadd.f32 %v854, %v431
    %v856 = vadd.f32 %v855, %v439
    %v857 = vadd.f32 %v856, %v447
    %v858 = vadd.f32 %v857, %v455
    %v859 = vadd.f32 %v858, %v463
    %v860 = vadd.f32 %v859, %v471
    %v861 = vadd.f32 %v860, %v479
    %v862 = vadd.f32 %v861, %v487
    %v863 = vadd.f32 %v862, %v495
    %v864 = vadd.f32 %v863, %v503
    %v865 = vadd.f32 %v864, %v511
    %v866 = vadd.f32 %v865, %v519
    %v867 = vadd.f32 %v866, %v527
    %v868 = vadd.f32 %v867, %v535
    %v869 = vadd.f32 %v868, %v543
    %v870 = vadd.f32 %v40, %v48
    %v871 = vadd.f32 %v870, %v56
    %v872 = vadd.f32 %v871, %v64
    %v873 = vadd.f32 %v872, %v72
    %v874 = vadd.f32 %v873, %v80
    %v875 = vadd.f32 %v874, %v88
    %v876 = vadd.f32 %v875, %v96
    %v877 = vadd.f32 %v876, %v104
    %v878 = vadd.f32 %v877, %v112
    %v879 = vadd.f32 %v878, %v120
    %v880 = vadd.f32 %v879, %v128
    %v881 = vadd.f32 %v880, %v136
    %v882 = vadd.f32 %v881, %v144
    %v883 = vadd.f32 %v882, %v152
    %v884 = vadd.f32 %v883, %v160
    %v885 = vadd.f32 %v884, %v168
    %v886 = vadd.f32 %v885, %v176
    %v887 = vadd.f32 %v886, %v184
    %v888 = vadd.f32 %v887, %v192
    %v889 = vadd.f32 %v888, %v200
    %v890 = vadd.f32 %v889, %v208
    %v891 = vadd.f32 %v890, %v216
    %v892 = vadd.f32 %v891, %v224
    %v893 = vadd.f32 %v892, %v232
    %v894 = vadd.f32 %v893, %v240
    %v895 = vadd.f32 %v894, %v248
    %v896 = vadd.f32 %v895, %v256
    %v897 = vadd.f32 %v896, %v264
    %v898 = vadd.f32 %v897, %v272
    %v899 = vadd.f32 %v898, %v280
    %v900 = vadd.f32 %v899, %v288
    %v901 = vadd.f32 %v900, %v296
    %v902 = vadd.f32 %v901, %v304
    %v903 = vadd.f32 %v902, %v312
    %v904 = vadd.f32 %v903, %v320
    %v905 = vadd.f32 %v904, %v328
    %v906 = vadd.f32 %v905, %v336
    %v907 = vadd.f32 %v906, %v344
    %v908 = vadd.f32 %v907, %v352
    %v909 = vadd.f32 %v908, %v360
    %v910 = vadd.f32 %v909, %v368
    %v911 = vadd.f32 %v910, %v376
    %v912 = vadd.f32 %v911, %v384
    %v913 = vadd.f32 %v912, %v392
    %v914 = vadd.f32 %v913, %v400
    %v915 = vadd.f32 %v914, %v408
    %v916 = vadd.f32 %v915, %v416
    %v917 = vadd.f32 %v916, %v424
    %v918 = vadd.f32 %v917, %v432
    %v919 = vadd.f32 %v918, %v440
    %v920 = vadd.f32 %v919, %v448
    %v921 = vadd.f32 %v920, %v456
    %v922 = vadd.f32 %v921, %v464
    %v923 = vadd.f32 %v922, %v472
    %v924 = vadd.f32 %v923, %v480
    %v925 = vadd.f32 %v924, %v488
    %v926 = vadd.f32 %v925, %v496
    %v927 = vadd.f32 %v926, %v504
    %v928 = vadd.f32 %v927, %v512
    %v929 = vadd.f32 %v928, %v520
    %v930 = vadd.f32 %v929, %v528
    %v931 = vadd.f32 %v930, %v536
    %v932 = vadd.f32 %v931, %v544
    %v933 = vadd.f32 %v41, %v49
    %v934 = vadd.f32 %v933, %v57
    %v935 = vadd.f32 %v934, %v65
    %v936 = vadd.f32 %v935, %v73
    %v937 = vadd.f32 %v936, %v81
    %v938 = vadd.f32 %v937, %v89
    %v939 = vadd.f32 %v938, %v97
    %v940 = vadd.f32 %v939, %v105
    %v941 = vadd.f32 %v940, %v113
    %v942 = vadd.f32 %v941, %v121
    %v943 = vadd.f32 %v942, %v129
    %v944 = vadd.f32 %v943, %v137
    %v945 = vadd.f32 %v944, %v145
    %v946 = vadd.f32 %v945, %v153
    %v947 = vadd.f32 %v946, %v161
    %v948 = vadd.f32 %v947, %v169
    %v949 = vadd.f32 %v948, %v177
    %v950 = vadd.f32 %v949, %v185
    %v951 = vadd.f32 %v950, %v193
    %v952 = vadd.f32 %v951, %v201
    %v953 = vadd.f32 %v952, %v209
    %v954 = vadd.f32 %v953, %v217
    %v955 = vadd.f32 %v954, %v225
    %v956 = vadd.f32 %v955, %v233
    %v957 = vadd.f32 %v956, %v241
    %v958 = vadd.f32 %v957, %v249
    %v959 = vadd.f32 %v958, %v257
    %v960 = vadd.f32 %v959, %v265
    %v961 = vadd.f32 %v960, %v273
    %v962 = vadd.f32 %v961, %v281
    %v963 = vadd.f32 %v962, %v289
    %v964 = vadd.f32 %v963, %v297
    %v965 = vadd.f32 %v964, %v305
    %v966 = vadd.f32 %v965, %v313
    %v967 = vadd.f32 %v966, %v321
    %v968 = vadd.f32 %v967, %v329
    %v969 = vadd.f32 %v968, %v337
    %v970 = vadd.f32 %v969, %v345
    %v971 = vadd.f32 %v970, %v353
    %v972 = vadd.f32 %v971, %v361
    %v973 = vadd.f32 %v972, %v369
    %v974 = vadd.f32 %v973, %v377
    %v975 = vadd.f32 %v974, %v385
    %v976 = vadd.f32 %v975, %v393
    %v977 = vadd.f32 %v976, %v401
    %v978 = vadd.f32 %v977, %v409
    %v979 = vadd.f32 %v978, %v417
    %v980 = vadd.f32 %v979, %v425
    %v981 = vadd.f32 %v980, %v433
    %v982 = vadd.f32 %v981, %v441
    %v983 = vadd.f32 %v982, %v449
    %v984 = vadd.f32 %v983, %v457
    %v985 = vadd.f32 %v984, %v465
    %v986 = vadd.f32 %v985, %v473
    %v987 = vadd.f32 %v986, %v481
    %v988 = vadd.f32 %v987, %v489
    %v989 = vadd.f32 %v988, %v497
    %v990 = vadd.f32 %v989, %v505
    %v991 = vadd.f32 %v990, %v513
    %v992 = vadd.f32 %v991, %v521
    %v993 = vadd.f32 %v992, %v529
    %v994 = vadd.f32 %v993, %v537
    %v995 = vadd.f32 %v994, %v545
    %v996 = vadd.f32 %v42, %v50
    %v997 = vadd.f32 %v996, %v58
    %v998 = vadd.f32 %v997, %v66
    %v999 = vadd.f32 %v998, %v74
    %v1000 = vadd.f32 %v999, %v82
    %v1001 = vadd.f32 %v1000, %v90
    %v1002 = vadd.f32 %v1001, %v98
    %v1003 = vadd.f32 %v1002, %v106
    %v1004 = vadd.f32 %v1003, %v114
    %v1005 = vadd.f32 %v1004, %v122
    %v1006 = vadd.f32 %v1005, %v130
    %v1007 = vadd.f32 %v1006, %v138
    %v1008 = vadd.f32 %v1007, %v146
    %v1009 = vadd.f32 %v1008, %v154
    %v1010 = vadd.f32 %v1009, %v162
    %v1011 = vadd.f32 %v1010, %v170
    %v1012 = vadd.f32 %v1011, %v178
    %v1013 = vadd.f32 %v1012, %v186
    %v1014 = vadd.f32 %v1013, %v194
    %v1015 = vadd.f32 %v1014, %v202
    %v1016 = vadd.f32 %v1015, %v210
    %v1017 = vadd.f32 %v1016, %v218
    %v1018 = vadd.f32 %v1017, %v226
    %v1019 = vadd.f32 %v1018, %v234
    %v1020 = vadd.f32 %v1019, %v242
    %v1021 = vadd.f32 %v1020, %v250
    %v1022 = vadd.f32 %v1021, %v258
    %v1023 = vadd.f32 %v1022, %v266
    %v1024 = vadd.f32 %v1023, %v274
    %v1025 = vadd.f32 %v1024, %v282
    %v1026 = vadd.f32 %v1025, %v290
    %v1027 = vadd.f32 %v1026, %v298
    %v1028 = vadd.f32 %v1027, %v306
    %v1029 = vadd.f32 %v1028, %v314
    %v1030 = vadd.f32 %v1029, %v322
    %v1031 = vadd.f32 %v1030, %v330
    %v1032 = vadd.f32 %v1031, %v338
    %v1033 = vadd.f32 %v1032, %v346
    %v1034 = vadd.f32 %v1033, %v354
    %v1035 = vadd.f32 %v1034, %v362
    %v1036 = vadd.f32 %v1035, %v370
    %v1037 = vadd.f32 %v1036, %v378
    %v1038 = vadd.f32 %v1037, %v386
    %v1039 = vadd.f32 %v1038, %v394
    %v1040 = vadd.f32 %v1039, %v402
    %v1041 = vadd.f32 %v1040, %v410
    %v1042 = vadd.f32 %v1041, %v418
    %v1043 = vadd.f32 %v1042, %v426
    %v1044 = vadd.f32 %v1043, %v434
    %v1045 = vadd.f32 %v1044, %v442
    %v1046 = vadd.f32 %v1045, %v450
    %v1047 = vadd.f32 %v1046, %v458
    %v1048 = vadd.f32 %v1047, %v466
    %v1049 = vadd.f32 %v1048, %v474
    %v1050 = vadd.f32 %v1049, %v482
    %v1051 = vadd.f32 %v1050, %v490
    %v1052 = vadd.f32 %v1051, %v498
    %v1053 = vadd.f32 %v1052, %v506
    %v1054 = vadd.f32 %v1053, %v514
    %v1055 = vadd.f32 %v1054, %v522
    %v1056 = vadd.f32 %v1055, %v530
    %v1057 = vadd.f32 %v1056, %v538
    %v1058 = vadd.f32 %v1057, %v546
    %v1059 = vadd.f32 %v547, %v617
    %v1060 = vadd.f32 %v548, %v680
    %v1061 = vadd.f32 %v549, %v743
    %v1062 = vadd.f32 %v550, %v806
    %v1063 = vadd.f32 %v551, %v869
    %v1064 = vadd.f32 %v552, %v932
    %v1065 = vadd.f32 %v553, %v995
    %v1066 = vadd.f32 %v554, %v1058
    %1067 = vst [vmem:[#allocation5] sm:$0xff] %v1059
    %1068 = vst [vmem:[#allocation5 + $0x8] sm:$0xff] %v1060
    %1069 = vst [vmem:[#allocation5 + $0x10] sm:$0xff] %v1061
    %1070 = vst [vmem:[#allocation5 + $0x18] sm:$0xff] %v1062
    %1071 = vst [vmem:[#allocation5 + $0x20] sm:$0xff] %v1063
    %1072 = vst [vmem:[#allocation5 + $0x28] sm:$0xff] %v1064
    %1073 = vst [vmem:[#allocation5 + $0x30] sm:$0xff] %v1065
    %1074 = vst [vmem:[#allocation5 + $0x38] sm:$0xff] %v1066
    // Predicated region
    $region14: #{tpu_custom_call.1} parent=1 // pred_check
      _
    $region15: #{tpu_custom_call.1} parent=1 // pred_check_branch
      %1076 = sbr.rel (0) target = $region17
    $region16: #{tpu_custom_call.1} parent=1 // pred_region
      %s1078 = ssub.s32 1024, 1024
      %1079 = vsyncadd [#allocation4], %s1078
      %s1080 = sshll.u32 [#allocation5], 4
      %s1081 = int_to_ptr.vmem [resolvable:$true] %s1080
      %1086 = dma.vmem_to_hbm [thread:$0]  %s1081, 1024, %s1, [#allocation4], 128, 128, 8
    $region17: #{tpu_custom_call.1} parent=1 // pred_fallthru
      _
    // Predicated region
    $region18: #{tpu_custom_call.1} parent=1 // pred_check
      _
    $region19: #{tpu_custom_call.1} parent=1 // pred_check_branch
      %1088 = sbr.rel (0) target = $region21
    $region20: #{tpu_custom_call.1} parent=1 // pred_region
      %1089 = dma.done [#allocation4], 1024
    $region21: #{tpu_custom_call.1} parent=1 // pred_fallthru
      _
    %1090 = vsyncpa [#allocation3], 1
    %1091 = vsyncpa [#allocation4], 1

</llo_original>
